<compile_context>
chip_gen: v5e
topology: v5e:2x2
jax: 0.10.0
libtpu: 0.0.40
codegen_flags: <defaults>
</compile_context>

<pallas_src>
import math
import functools

import jax
import jax.numpy as jnp
from jax import lax
from jax.experimental import pallas as pl
from jax.experimental.pallas import tpu as pltpu


def attn_head_kernel(x_ref, wqkv_ref, bqkv_ref, o_ref, *, Bt, S, Hp):
    """x_ref: (Bt*S, E) bf16; wqkv_ref: (E, 3*Hp) bf16 (Q cols pre-scaled by 1/sqrt(H));
    bqkv_ref: (1, 3*Hp) f32; o_ref: (Bt*S, Hp) bf16."""
    # --- Fused QKV projection: one MXU matmul over Bt*S rows, bf16 in / f32 accumulate ---
    qkv = jnp.dot(x_ref[...], wqkv_ref[...], preferred_element_type=jnp.float32)
    qkv = qkv + bqkv_ref[...]                       # single (1, 3*Hp) broadcast bias add

    # Lane-aligned slices at multiples of Hp (=128): no cross-lane shuffles.
    q = qkv[:, 0 * Hp:1 * Hp].reshape(Bt, S, Hp).astype(jnp.bfloat16)
    k = qkv[:, 1 * Hp:2 * Hp].reshape(Bt, S, Hp).astype(jnp.bfloat16)
    v = qkv[:, 2 * Hp:3 * Hp].reshape(Bt, S, Hp).astype(jnp.bfloat16)

    # --- Scaled dot-product attention (scale already folded into Q; softmax in f32) ---
    # Batched transposed contraction: (Bt,S,Hp) x (Bt,S,Hp) -> (Bt,S,S); no explicit k.T.
    scores = lax.dot_general(
        q, k,
        dimension_numbers=(((2,), (2,)), ((0,), (0,))),
        preferred_element_type=jnp.float32,
    )

    m = jnp.max(scores, axis=-1, keepdims=True)
    p = jnp.exp(scores - m)
    denom = jnp.sum(p, axis=-1, keepdims=True)
    # approx=True uses the EUP reciprocal (separate bundle slot, ~1e-3 rel error) --
    # intentional; covered by the test tolerance.
    weights = (p * pl.reciprocal(denom, approx=True)).astype(jnp.bfloat16)

    # (Bt,S,S) @ (Bt,S,Hp) -> (Bt,S,Hp); padded V columns are zero -> padded output is zero.
    out = lax.dot_general(
        weights, v,
        dimension_numbers=(((2,), (1,)), ((0,), (0,))),
        preferred_element_type=jnp.float32,
    )
    # Lane-dense (last dim = Hp = 128) unmasked store; leading-dim merge is layout-preserving.
    o_ref[...] = out.reshape(Bt * S, Hp).astype(o_ref.dtype)
    # TODO(synk): for long sequences replace the monolithic (S,S) score matrix with a tiled
    # online-softmax (flash) structure so VMEM stays O(tq*tk); on v7x this is needed at ~2x
    # smaller S than v6e (64 MiB vs 128 MiB VMEM).
    # TODO(synk): when used inside a multi-head layer, fuse heads so the projection N-dim is
    # 3*H*num_heads and the AV output lane dim is H*num_heads (raises MXU utilization and
    # removes the need for Hp padding); on v7x, fp8 weights are a further option.


def _vmem_budget_bytes():
    """Usable VMEM budget with headroom: ~96 MiB on v5e/v6e (128 MiB), ~48 MiB on v7x (64 MiB)."""
    cap = None
    try:
        cap = getattr(pltpu.get_tpu_info(), "vmem_capacity_bytes", None)
    except Exception:
        cap = None
    if not cap:
        cap = 64 * 1024 * 1024          # conservative fallback (v7x-sized)
    return int(cap * 3 // 4)


def _choose_block_batch(B, S, E, Hp, vmem_budget):
    """Largest divisor Bt of B such that the per-step working set uses <= ~1/2 of the VMEM
    budget, capped at B//2 so the parallel grid axis has length >= 2 (v7x has 2 TCs/chip)."""
    target = vmem_budget // 2
    bt_cap = max(1, B // 2)

    def working_set(bt):
        rows = bt * S
        x_tile = 2 * rows * E * 2            # bf16 x, double-buffered
        o_tile = 2 * rows * Hp * 2           # bf16 out, double-buffered
        w_tile = 2 * E * 3 * Hp * 2          # bf16 fused weights (conservatively x2)
        b_tile = 2 * 3 * Hp * 4              # f32 fused bias
        qkv_f32 = rows * 3 * Hp * 4
        qkv_bf16 = rows * 3 * Hp * 2
        scores = 2 * bt * S * S * 4          # scores + exp(scores), f32
        out_f32 = rows * Hp * 4
        return x_tile + o_tile + w_tile + b_tile + qkv_f32 + qkv_bf16 + scores + out_f32

    best = 1
    for d in range(1, bt_cap + 1):
        if B % d == 0 and working_set(d) <= target:
            best = d
    return best


def attention_head(hidden_state, wq, wk, wv, bq, bk, bv, *, block_batch=None):
    """hidden_state: (B, S, E); wq/wk/wv: (E, H); bq/bk/bv: (1, H) -> (B, S, H)."""
    B, S, E = hidden_state.shape
    H = wq.shape[1]
    Hp = max(128, ((H + 127) // 128) * 128)          # pad each Q/K/V group to lane multiple

    # Host-side fusion + padding: (E, 3*Hp) bf16 weights, (1, 3*Hp) f32 bias.
    # 1/sqrt(H) folded into the Q columns; padded columns are zero.
    scale = 1.0 / math.sqrt(H)
    wqkv = jnp.zeros((E, 3 * Hp), jnp.float32)
    wqkv = wqkv.at[:, 0:H].set(wq * scale)
    wqkv = wqkv.at[:, Hp:Hp + H].set(wk)
    wqkv = wqkv.at[:, 2 * Hp:2 * Hp + H].set(wv)
    wqkv = wqkv.astype(jnp.bfloat16)

    bqkv = jnp.zeros((1, 3 * Hp), jnp.float32)
    bqkv = bqkv.at[:, 0:H].set(bq.reshape(1, H) * scale)
    bqkv = bqkv.at[:, Hp:Hp + H].set(bk.reshape(1, H))
    bqkv = bqkv.at[:, 2 * Hp:2 * Hp + H].set(bv.reshape(1, H))

    # bf16 HBM input (halves input DMA traffic); pre-flattened so the kernel does no x reshape.
    x_flat = hidden_state.reshape(B * S, E).astype(jnp.bfloat16)

    vmem_budget = _vmem_budget_bytes()
    Bt = block_batch if block_batch is not None else _choose_block_batch(B, S, E, Hp, vmem_budget)
    assert B % Bt == 0, (B, Bt)

    kernel = functools.partial(attn_head_kernel, Bt=Bt, S=S, Hp=Hp)

    grid_spec = pltpu.PrefetchScalarGridSpec(
        num_scalar_prefetch=0,
        grid=(B // Bt,),
        in_specs=[
            pl.BlockSpec((Bt * S, E), lambda b: (b, 0)),       # x rows for Bt batch elements
            pl.BlockSpec((E, 3 * Hp), lambda b: (0, 0)),       # fused Wqkv (full, resident)
            pl.BlockSpec((1, 3 * Hp), lambda b: (0, 0)),       # fused bias (full, resident)
        ],
        out_specs=pl.BlockSpec((Bt * S, Hp), lambda b: (b, 0)),  # lane-dense (last dim 128)
    )
    # TODO(synk): pipeline_mode=pl.Buffered(1) on the constant-index weight/bias specs would
    # reclaim their duplicate VMEM buffer (matters most on v7x); weights here are only ~24 KiB.

    out_pad = pl.pallas_call(
        kernel,
        out_shape=jax.ShapeDtypeStruct((B * S, Hp), jnp.bfloat16),
        grid_spec=grid_spec,
        compiler_params=pltpu.CompilerParams(
            dimension_semantics=("parallel",),
            vmem_limit_bytes=vmem_budget,
        ),
    )(x_flat, wqkv, bqkv)

    # Drop zero padding and restore (B, S, H) in the wrapper (cheap XLA slice/reshape).
    return out_pad[:, :H].reshape(B, S, H).astype(hidden_state.dtype)


def reference_attention_head(hidden_state, wq, wk, wv, bq, bk, bv):
    q = hidden_state @ wq + bq
    k = hidden_state @ wk + bk
    v = hidden_state @ wv + bv
    scores = jnp.einsum("bqd,bkd->bqk", q, k) / math.sqrt(k.shape[-1])
    w = jax.nn.softmax(scores, axis=-1)
    return jnp.einsum("bqk,bkd->bqd", w, v)


if __name__ == "__main__":
    # Small shapes consistent with the module: batch=2, seq=8, embed_dim=32, head_dim=16.
    B, S, E, H = 2, 8, 32, 16
    key = jax.random.PRNGKey(0)
    kx, kwq, kwk, kwv, kbq, kbk, kbv = jax.random.split(key, 7)

    hidden_state = jax.random.normal(kx, (B, S, E), dtype=jnp.float32)

    # Deterministic parameter init (mimics nn.Linear uniform(-1/sqrt(E), 1/sqrt(E)))
    bound = 1.0 / math.sqrt(E)
    u = functools.partial(jax.random.uniform, minval=-bound, maxval=bound, dtype=jnp.float32)
    wq = u(kwq, (E, H)); wk = u(kwk, (E, H)); wv = u(kwv, (E, H))
    bq = u(kbq, (1, H)); bk = u(kbk, (1, H)); bv = u(kbv, (1, H))

    out = attention_head(hidden_state, wq, wk, wv, bq, bk, bv)
    out = jax.block_until_ready(out)

    ref = reference_attention_head(hidden_state, wq, wk, wv, bq, bk, bv)
    assert out.shape == (B, S, H), out.shape
    # bf16 HBM I/O + bf16 MXU inputs (f32 accumulation) + approx reciprocal -> loosened tolerance.
    max_diff = float(jnp.max(jnp.abs(out - ref)))
    assert jnp.allclose(out, ref, atol=5e-2, rtol=5e-2), f"mismatch vs reference, max|diff|={max_diff}"

    print("KERNEL_OK")
</pallas_src>

<mosaic_0001>
module attributes {stable_mosaic.version = 11 : i64} {
  func.func @attn_head_kernel(%arg0: i32, %arg1: memref<8x32xbf16, #tpu.memory_space<vmem>>, %arg2: memref<32x384xbf16, #tpu.memory_space<vmem>>, %arg3: memref<1x384xf32, #tpu.memory_space<vmem>>, %arg4: memref<8x128xbf16, #tpu.memory_space<vmem>>) attributes {dimension_semantics = [#tpu.dimension_semantics<parallel>], iteration_bounds = array<i64: 2>, scalar_prefetch = 0 : i64, scratch_operands = 0 : i64, tpu.core_type = #tpu.core_type<tc>, window_params = [{transform_indices = @transform_0, window_bounds = array<i64: 8, 32>}, {pipeline_mode = #tpu.pipeline_mode<synchronous>, transform_indices = @transform_1, window_bounds = array<i64: 32, 384>}, {pipeline_mode = #tpu.pipeline_mode<synchronous>, transform_indices = @transform_2, window_bounds = array<i64: 1, 384>}, {transform_indices = @transform_3, window_bounds = array<i64: 8, 128>}]} {
    %c0 = arith.constant 0 : index
    %c0_0 = arith.constant 0 : index
    %0 = vector.load %arg1[%c0, %c0_0] : memref<8x32xbf16, #tpu.memory_space<vmem>>, vector<8x32xbf16>
    %c0_1 = arith.constant 0 : index
    %c0_2 = arith.constant 0 : index
    %1 = vector.load %arg2[%c0_1, %c0_2] : memref<32x384xbf16, #tpu.memory_space<vmem>>, vector<32x384xbf16>
    %cst = arith.constant dense<0.000000e+00> : vector<8x384xf32>
    %2 = tpu.matmul %0, %1, %cst {dimension_numbers = #tpu.dot_dimension_numbers<[1], [0], [0], [1], [0, 0, 1, 1], [], []>} : vector<8x32xbf16>, vector<32x384xbf16>, vector<8x384xf32> -> vector<8x384xf32>
    %c0_3 = arith.constant 0 : index
    %c0_4 = arith.constant 0 : index
    %3 = vector.load %arg3[%c0_3, %c0_4] : memref<1x384xf32, #tpu.memory_space<vmem>>, vector<1x384xf32>
    %4 = vector.broadcast %3 : vector<1x384xf32> to vector<8x384xf32>
    %5 = arith.addf %2, %4 : vector<8x384xf32>
    %6 = vector.extract_strided_slice %5 {offsets = [0, 0], sizes = [8, 128], strides = [1, 1]} : vector<8x384xf32> to vector<8x128xf32>
    %7 = vector.shape_cast %6 : vector<8x128xf32> to vector<1x8x128xf32>
    %8 = arith.truncf %7 : vector<1x8x128xf32> to vector<1x8x128xbf16>
    %9 = vector.extract_strided_slice %5 {offsets = [0, 128], sizes = [8, 128], strides = [1, 1]} : vector<8x384xf32> to vector<8x128xf32>
    %10 = vector.shape_cast %9 : vector<8x128xf32> to vector<1x8x128xf32>
    %11 = arith.truncf %10 : vector<1x8x128xf32> to vector<1x8x128xbf16>
    %12 = vector.extract_strided_slice %5 {offsets = [0, 256], sizes = [8, 128], strides = [1, 1]} : vector<8x384xf32> to vector<8x128xf32>
    %13 = vector.shape_cast %12 : vector<8x128xf32> to vector<1x8x128xf32>
    %14 = arith.truncf %13 : vector<1x8x128xf32> to vector<1x8x128xbf16>
    %cst_5 = arith.constant dense<0.000000e+00> : vector<1x8x8xf32>
    %15 = tpu.matmul %8, %11, %cst_5 {dimension_numbers = #tpu.dot_dimension_numbers<[2], [2], [1], [1], [0, 0, 0, 1, 1, 1], [0], [0]>} : vector<1x8x128xbf16>, vector<1x8x128xbf16>, vector<1x8x8xf32> -> vector<1x8x8xf32>
    %cst_6 = arith.constant dense<0xFF800000> : vector<1x8xf32>
    %16 = vector.multi_reduction <maximumf>, %15, %cst_6 [2] : vector<1x8x8xf32> to vector<1x8xf32>
    %17 = vector.shape_cast %16 : vector<1x8xf32> to vector<1x8x1xf32>
    %18 = vector.broadcast %17 : vector<1x8x1xf32> to vector<1x8x8xf32>
    %19 = arith.subf %15, %18 : vector<1x8x8xf32>
    %20 = math.exp %19 : vector<1x8x8xf32>
    %cst_7 = arith.constant dense<0.000000e+00> : vector<1x8xf32>
    %21 = vector.multi_reduction <add>, %20, %cst_7 [2] : vector<1x8x8xf32> to vector<1x8xf32>
    %22 = vector.shape_cast %21 : vector<1x8xf32> to vector<1x8x1xf32>
    %23 = tpu.reciprocal %22 {approx = true} : vector<1x8x1xf32> -> vector<1x8x1xf32>
    %24 = vector.broadcast %23 : vector<1x8x1xf32> to vector<1x8x8xf32>
    %25 = arith.mulf %20, %24 : vector<1x8x8xf32>
    %26 = arith.truncf %25 : vector<1x8x8xf32> to vector<1x8x8xbf16>
    %cst_8 = arith.constant dense<0.000000e+00> : vector<1x8x128xf32>
    %27 = tpu.matmul %26, %14, %cst_8 {dimension_numbers = #tpu.dot_dimension_numbers<[2], [1], [1], [2], [0, 0, 0, 1, 1, 2], [0], [0]>} : vector<1x8x8xbf16>, vector<1x8x128xbf16>, vector<1x8x128xf32> -> vector<1x8x128xf32>
    %28 = vector.shape_cast %27 : vector<1x8x128xf32> to vector<8x128xf32>
    %29 = arith.truncf %28 : vector<8x128xf32> to vector<8x128xbf16>
    %c0_9 = arith.constant 0 : index
    %c0_10 = arith.constant 0 : index
    %30 = vector.load %arg4[%c0_9, %c0_10] : memref<8x128xbf16, #tpu.memory_space<vmem>>, vector<8x128xbf16>
    tpu.vector_store %arg4[%c0_9, %c0_10], %29 {strides = array<i32>} : memref<8x128xbf16, #tpu.memory_space<vmem>>, vector<8x128xbf16>,
    return
  }
  func.func @transform_0(%arg0: i32) -> (i32, i32) {
    %c0_i32 = arith.constant 0 : i32
    %c0_i32_0 = arith.constant 0 : i32
    return %arg0, %c0_i32 : i32, i32
  }
  func.func @transform_1(%arg0: i32) -> (i32, i32) {
    %c0_i32 = arith.constant 0 : i32
    %c0_i32_0 = arith.constant 0 : i32
    %c0_i32_1 = arith.constant 0 : i32
    return %c0_i32, %c0_i32_0 : i32, i32
  }
  func.func @transform_2(%arg0: i32) -> (i32, i32) {
    %c0_i32 = arith.constant 0 : i32
    %c0_i32_0 = arith.constant 0 : i32
    %c0_i32_1 = arith.constant 0 : i32
    return %c0_i32, %c0_i32_0 : i32, i32
  }
  func.func @transform_3(%arg0: i32) -> (i32, i32) {
    %c0_i32 = arith.constant 0 : i32
    %c0_i32_0 = arith.constant 0 : i32
    return %arg0, %c0_i32 : i32, i32
  }
}

</mosaic_0001>

<llo_original>
// kernel: tpu_custom_call.1
$region0: #{tpu_custom_call.1}
  #allocation0 [shape = 'u32[]', space=smem, size = 0x4, offset = 0x4, fixed_abs, tag = 'smem constant byte address 0x4 - core index']
  #allocation1 [shape = 'u32[72,128]{1,0:T(1,128)}', space=vmem, size = 0x9000, scoped, tag = 'internal scratch']
  %s0 = inlined_call_operand.hbm [shape: bf16[16,32], index: 0, kind: input, shape index: {}]
  %s1 = inlined_call_operand.hbm [shape: bf16[32,384], index: 1, kind: input, shape index: {}]
  %s2 = inlined_call_operand.hbm [shape: f32[1,384], index: 2, kind: input, shape index: {}]
  %s3 = inlined_call_operand.hbm [shape: bf16[16,128], index: 3, kind: output, shape index: {}]
  %s4 = sld [smem:[#allocation0]]
  $region57: #{tpu_custom_call.1} parent=0
    _
  %s6 = ssub.s32 1, %s4
  %s7 = scalar_select 0, %s6, %s4
  $region1: #{tpu_custom_call.1} parent=0
    #allocation2 [shape = 'u8[4096]{0}', space=vmem, size = 0x1000, scoped, tag = 'input window, operand 0']
    #allocation3 [shape = 's32[2]{0}', space=sflag, size = 0x8, scoped, tag = 'scoped memory for tpu_custom_call.1']
    #allocation4 [shape = 's32[2]{0}', space=sflag, size = 0x8, scoped, tag = 'scoped memory for tpu_custom_call.1']
    #allocation5 [shape = 'u8[24576]{0}', space=vmem, size = 0x6000, scoped, tag = 'input window, operand 1, single buffered']
    #allocation6 [shape = 's32[1]{0}', space=sflag, size = 0x4, scoped, tag = 'scoped memory for tpu_custom_call.1']
    #allocation7 [shape = 'u8[1536]{0}', space=vmem, size = 0x800, scoped, tag = 'input window, operand 2, single buffered']
    #allocation8 [shape = 'u8[4096]{0}', space=vmem, size = 0x1000, scoped, tag = 'output window, operand 0']
    %8 = vsyncpa [#allocation3], 0
    %s9 = scalar_lea.sflag [#allocation3], 1
    %10 = vsyncpa %s9, 0
    %11 = vsyncpa [#allocation6], 0
    %12 = vsyncpa [#allocation4], 0
    %s13 = scalar_lea.sflag [#allocation4], 1
    %14 = vsyncpa %s13, 0
    loop: start=0, step=1, limit=4
    $region2: #{tpu_custom_call.1} parent=1 // loop_pre_header
      _
    $region3: #{tpu_custom_call.1} parent=1 // loop_header
      %s16 = sphi 0, %s20
      %p17 = scmp.ge.s32.totalorder %s16, 4
      %s26 = sphi 0, %s28
      %s29 = sphi 0, %s26
      %s30 = sphi 0, %s29
      %s46 = sphi 0, %s30
      %s50 = sphi 0, %s50
      %s52 = sphi 0, %s50
      %s53 = sphi 0, %s52
      %s67 = sphi 0, %s53
      %s71 = sphi 0, %s71
      %s73 = sphi 0, %s71
      %s74 = sphi 0, %s73
      %s88 = sphi 0, %s74
      %s94 = sphi 0, %s96
      %s97 = sphi 0, %s94
      %s98 = sphi 0, %s97
      %s114 = sphi 0, %s98
    $region4: #{tpu_custom_call.1} parent=1 // loop_header_branch
      %19 = sbr.rel (%p17) target = $region8
    $region5: #{tpu_custom_call.1} parent=1 // loop_body
      %s21 = ssub.s32 %s16, 1
      %s22 = ssub.s32 %s16, 2
      %s23 = sadd.s32 %s16, 1
      %s24 = ssub.s32 %s16, %s23
      %p25 = scmp.eq.s32.totalorder %s24, 0
      %s27 = sadd.s32 %s26, 1
      %s28 = scalar_select %p25, %s26, %s27
      %p31 = pneg %p25
      %p32 = scmp.eq.s32.totalorder %s16, 1
      %p33 = por %p31, %p32
      %p34 = scmp.ne.s32.totalorder %s26, %s29
      %p35 = scmp.eq.s32.totalorder %s16, 0
      %p36 = por %p34, %p35
      %p37 = scmp.ne.s32.totalorder %s26, %s29
      %p38 = scmp.eq.s32.totalorder %s21, 1
      %p39 = por %p37, %p38
      %p40 = scmp.ne.s32.totalorder %s29, %s30
      %p41 = scmp.eq.s32.totalorder %s21, 0
      %p42 = por %p40, %p41
      %p43 = scmp.ne.s32.totalorder %s29, %s30
      %p44 = scmp.eq.s32.totalorder %s22, 1
      %p45 = por %p43, %p44
      %p47 = scmp.ne.s32.totalorder %s30, %s46
      %p48 = scmp.eq.s32.totalorder %s22, 0
      %p49 = por %p47, %p48
      %s51 = sadd.s32 %s50, 1
      %p54 = scmp.eq.s32.totalorder %s16, 1
      %p55 = scmp.ne.s32.totalorder %s50, %s52
      %p56 = scmp.eq.s32.totalorder %s16, 0
      %p57 = por %p55, %p56
      %p58 = scmp.ne.s32.totalorder %s50, %s52
      %p59 = scmp.eq.s32.totalorder %s21, 1
      %p60 = por %p58, %p59
      %p61 = scmp.ne.s32.totalorder %s52, %s53
      %p62 = scmp.eq.s32.totalorder %s21, 0
      %p63 = por %p61, %p62
      %p64 = scmp.ne.s32.totalorder %s52, %s53
      %p65 = scmp.eq.s32.totalorder %s22, 1
      %p66 = por %p64, %p65
      %p68 = scmp.ne.s32.totalorder %s53, %s67
      %p69 = scmp.eq.s32.totalorder %s22, 0
      %p70 = por %p68, %p69
      %s72 = sadd.s32 %s71, 1
      %p75 = scmp.eq.s32.totalorder %s16, 1
      %p76 = scmp.ne.s32.totalorder %s71, %s73
      %p77 = scmp.eq.s32.totalorder %s16, 0
      %p78 = por %p76, %p77
      %p79 = scmp.ne.s32.totalorder %s71, %s73
      %p80 = scmp.eq.s32.totalorder %s21, 1
      %p81 = por %p79, %p80
      %p82 = scmp.ne.s32.totalorder %s73, %s74
      %p83 = scmp.eq.s32.totalorder %s21, 0
      %p84 = por %p82, %p83
      %p85 = scmp.ne.s32.totalorder %s73, %s74
      %p86 = scmp.eq.s32.totalorder %s22, 1
      %p87 = por %p85, %p86
      %p89 = scmp.ne.s32.totalorder %s74, %s88
      %p90 = scmp.eq.s32.totalorder %s22, 0
      %p91 = por %p89, %p90
      %s92 = ssub.s32 %s16, %s23
      %p93 = scmp.eq.s32.totalorder %s92, 0
      %s95 = sadd.s32 %s94, 1
      %s96 = scalar_select %p93, %s94, %s95
      %p99 = pneg %p93
      %p100 = scmp.eq.s32.totalorder %s16, 1
      %p101 = por %p99, %p100
      %p102 = scmp.ne.s32.totalorder %s94, %s97
      %p103 = scmp.eq.s32.totalorder %s16, 0
      %p104 = por %p102, %p103
      %p105 = scmp.ne.s32.totalorder %s94, %s97
      %p106 = scmp.eq.s32.totalorder %s21, 1
      %p107 = por %p105, %p106
      %p108 = scmp.ne.s32.totalorder %s97, %s98
      %p109 = scmp.eq.s32.totalorder %s21, 0
      %p110 = por %p108, %p109
      %p111 = scmp.ne.s32.totalorder %s97, %s98
      %p112 = scmp.eq.s32.totalorder %s22, 1
      %p113 = por %p111, %p112
      %p115 = scmp.ne.s32.totalorder %s98, %s114
      %p116 = scmp.eq.s32.totalorder %s22, 0
      %p117 = por %p115, %p116
      %p118 = scmp.le.s32.totalorder 1, %s16
      %p119 = scmp.lt.s32.totalorder %s16, 3
      %p120 = pnand %p118, %p119
      %p121 = pneg %p120
      // Predicated region
      $region9: #{tpu_custom_call.1} parent=5 // pred_check
        _
      $region10: #{tpu_custom_call.1} parent=5 // pred_check_branch
        %123 = sbr.rel (%p120) target = $region12
      $region11: #{tpu_custom_call.1} parent=5 // pred_region
        %s124 = ssub.s32 %s16, 1
        // Predicated region
        $region13: #{tpu_custom_call.1} parent=11 // pred_check
          %p125 = pneg %p63
        $region14: #{tpu_custom_call.1} parent=11 // pred_check_branch
          %127 = sbr.rel (%p125) target = $region16
        $region15: #{tpu_custom_call.1} parent=11 // pred_region
          %129 = vsyncadd [#allocation6], 0
          %s130 = sshll.u32 %s1, 4
          %s131 = int_to_ptr.hbm [resolvable:$true] %s130
          %s132 = sshll.u32 [#allocation5], 4
          %s133 = int_to_ptr.vmem [resolvable:$true] %s132
          %138 = dma.hbm_to_vmem [thread:$0]  %s131, 768, %s133, [#allocation6], 192, 192, 12
        $region16: #{tpu_custom_call.1} parent=11 // pred_fallthru
          _
        // Predicated region
        $region17: #{tpu_custom_call.1} parent=11 // pred_check
          %p139 = pneg %p84
        $region18: #{tpu_custom_call.1} parent=11 // pred_check_branch
          %141 = sbr.rel (%p139) target = $region20
        $region19: #{tpu_custom_call.1} parent=11 // pred_region
          %143 = vsyncadd [#allocation6], 0
          %s145 = sshll.u32 %s2, 4
          %s146 = int_to_ptr.hbm [resolvable:$true] %s145
          %s147 = sshll.u32 [#allocation7], 4
          %s148 = int_to_ptr.vmem [resolvable:$true] %s147
          %150 = dma.hbm_to_vmem [thread:$0]  %s146, 48, %s148, [#allocation6]
        $region20: #{tpu_custom_call.1} parent=11 // pred_fallthru
          _
      $region12: #{tpu_custom_call.1} parent=5 // pred_fallthru
        _
      %p151 = scmp.lt.s32.totalorder %s16, 2
      // Predicated region
      $region21: #{tpu_custom_call.1} parent=5 // pred_check
        %p152 = pneg %p151
      $region22: #{tpu_custom_call.1} parent=5 // pred_check_branch
        %154 = sbr.rel (%p152) target = $region24
      $region23: #{tpu_custom_call.1} parent=5 // pred_region
        // Predicated region
        $region25: #{tpu_custom_call.1} parent=23 // pred_check
          %p155 = pneg %p36
        $region26: #{tpu_custom_call.1} parent=23 // pred_check_branch
          %157 = sbr.rel (%p155) target = $region28
        $region27: #{tpu_custom_call.1} parent=23 // pred_region
          %s158 = sand.u32 %s26, 1
          %s159 = scalar_lea.sflag [#allocation3], %s158
          %s160 = sand.u32 %s26, 1
          %s161 = smul.addr %s160, 4
          %s162 = scalar_lea.vmem [#allocation2], %s161
          %164 = vsyncadd %s159, 0
          %s165 = smul.addr %s16, 4
          %s166 = scalar_lea.hbm %s0, %s165
          %s168 = sshll.u32 %s166, 4
          %s169 = int_to_ptr.hbm [resolvable:$true] %s168
          %s170 = sshll.u32 %s162, 4
          %s171 = int_to_ptr.vmem [resolvable:$true] %s170
          %173 = dma.hbm_to_vmem [thread:$0]  %s169, 64, %s171, %s159
        $region28: #{tpu_custom_call.1} parent=23 // pred_fallthru
          _
      $region24: #{tpu_custom_call.1} parent=5 // pred_fallthru
        _
      %p174 = scmp.le.s32.totalorder 1, %s16
      %p175 = scmp.lt.s32.totalorder %s16, 3
      %p176 = pnand %p174, %p175
      %p177 = pneg %p176
      // Predicated region
      $region29: #{tpu_custom_call.1} parent=5 // pred_check
        _
      $region30: #{tpu_custom_call.1} parent=5 // pred_check_branch
        %179 = sbr.rel (%p176) target = $region32
      $region31: #{tpu_custom_call.1} parent=5 // pred_region
        %s180 = ssub.s32 %s16, 1
        %s181 = sand.u32 %s29, 1
        %s182 = scalar_lea.sflag [#allocation3], %s181
        %s183 = sand.u32 %s29, 1
        %s184 = smul.addr %s183, 4
        %s185 = scalar_lea.vmem [#allocation2], %s184
        // Predicated region
        $region33: #{tpu_custom_call.1} parent=31 // pred_check
          %p186 = pneg %p42
        $region34: #{tpu_custom_call.1} parent=31 // pred_check_branch
          %188 = sbr.rel (%p186) target = $region36
        $region35: #{tpu_custom_call.1} parent=31 // pred_region
          %190 = dma.done %s182, 64
        $region36: #{tpu_custom_call.1} parent=31 // pred_fallthru
          _
        // Predicated region
        $region37: #{tpu_custom_call.1} parent=31 // pred_check
          %p191 = pneg %p63
        $region38: #{tpu_custom_call.1} parent=31 // pred_check_branch
          %193 = sbr.rel (%p191) target = $region40
        $region39: #{tpu_custom_call.1} parent=31 // pred_region
          %195 = dma.done [#allocation6], 768
        $region40: #{tpu_custom_call.1} parent=31 // pred_fallthru
          _
        // Predicated region
        $region41: #{tpu_custom_call.1} parent=31 // pred_check
          %p196 = pneg %p84
        $region42: #{tpu_custom_call.1} parent=31 // pred_check_branch
          %198 = sbr.rel (%p196) target = $region44
        $region43: #{tpu_custom_call.1} parent=31 // pred_region
          %200 = dma.done [#allocation6], 48
        $region44: #{tpu_custom_call.1} parent=31 // pred_fallthru
          _
        %s201 = sand.u32 %s29, 1
        %s202 = scalar_lea.sflag [#allocation3], %s201
        %s203 = sand.u32 %s29, 1
        %s204 = smul.addr %s203, 4
        %s205 = scalar_lea.vmem [#allocation2], %s204
        %p206 = pneg %p42
        %p207 = pneg %p39
        %p208 = pneg %p63
        %p209 = pneg %p60
        %p210 = pneg %p84
        %p211 = pneg %p81
        %p212 = pneg %p110
        %p213 = pneg %p107
        %s214 = sand.u32 %s97, 1
        %s215 = scalar_lea.sflag [#allocation4], %s214
        %s216 = sand.u32 %s97, 1
        %s217 = smul.addr %s216, 4
        %s218 = scalar_lea.vmem [#allocation8], %s217
        %v220 = vld [vmem:[%s185] sm:$0xf]
        %v221 = vld [vmem:[#allocation5] sm:$0xff]
        %v222 = vld [vmem:[#allocation5 + $0x8] sm:$0xf]
        %v223 = vld [vmem:[#allocation5 + $0xc] sm:$0xff]
        %v224 = vld [vmem:[#allocation5 + $0x14] sm:$0xf]
        %v225 = vld [vmem:[#allocation5 + $0x18] sm:$0xff]
        %v226 = vld [vmem:[#allocation5 + $0x20] sm:$0xf]
        %v227 = vld [vmem:[#allocation5 + $0x24] sm:$0xff]
        %v228 = vld [vmem:[#allocation5 + $0x2c] sm:$0xf]
        %v229 = vld [vmem:[#allocation7] sm:$0x7]
        %v231 = vperm.slane %v229, 0
        %v232 = vperm.slane %v229, 1
        %v233 = vperm.slane %v229, 2
        %v245 = vunpack.c.l.b16 %v221
        %v246 = vunpack.c.h.b16 %v221
        %v247 = vunpack.c.l.b16 %v222
        %v248 = vunpack.c.l.b16 %v223
        %v249 = vunpack.c.h.b16 %v223
        %v250 = vunpack.c.l.b16 %v224
        %v251 = vunpack.c.l.b16 %v225
        %v252 = vunpack.c.h.b16 %v225
        %v253 = vunpack.c.l.b16 %v226
        %v254 = vunpack.c.l.b16 %v227
        %v255 = vunpack.c.h.b16 %v227
        %v256 = vunpack.c.l.b16 %v228
        %v257 = vpack.c.b16 %v248, %v245
        %v258 = vpack.c.b16 %v249, %v246
        %v259 = vpack.c.b16 %v250, %v247
        %v260 = vpack.c.b16 %v254, %v251
        %v261 = vpack.c.b16 %v255, %v252
        %v262 = vpack.c.b16 %v256, %v253
        %vm269 = vcmask 261120
        %v271 = vsel %vm269, %v220, 0
        %273 = vmatpush.bf16.msra.mxu0 0
        %274 = vmatpush.bf16.msra.mxu0 0
        %275 = vmatpush.bf16.msra.mxu0 0
        %276 = vmatpush.bf16.msra.mxu0 0
        %277 = vmatpush.bf16.msra.mxu0 0
        %278 = vmatpush.bf16.msra.mxu0 0
        %279 = vmatpush.bf16.msra.mxu0 %v260
        %280 = vmatpush.bf16.msra.mxu0 %v257
        %281 = vmatmul.bf16.gmra.mxu0 %v271
        %v282 = vpop.f32.mrf.mxu0
        %v283 = vadd.f32 %v231, %v282
        %v284 = vpop.f32.mrf.mxu0
        %285 = vdwg.mxu0
        %286 = vmatpush.bf16.msra.mxu0 0
        %287 = vmatpush.bf16.msra.mxu0 0
        %288 = vmatpush.bf16.msra.mxu0 0
        %289 = vmatpush.bf16.msra.mxu0 0
        %290 = vmatpush.bf16.msra.mxu0 0
        %291 = vmatpush.bf16.msra.mxu0 0
        %292 = vmatpush.bf16.msra.mxu0 %v261
        %293 = vmatpush.bf16.msra.mxu0 %v258
        %294 = vmatmul.bf16.gmra.mxu0 %v271
        %v295 = vpop.f32.mrf.mxu0
        %v296 = vadd.f32 %v232, %v295
        %v297 = vpop.f32.mrf.mxu0
        %298 = vdwg.mxu0
        %299 = vmatpush.bf16.msra.mxu0 0
        %300 = vmatpush.bf16.msra.mxu0 0
        %301 = vmatpush.bf16.msra.mxu0 0
        %302 = vmatpush.bf16.msra.mxu0 0
        %303 = vmatpush.bf16.msra.mxu0 0
        %304 = vmatpush.bf16.msra.mxu0 0
        %305 = vmatpush.bf16.msra.mxu0 %v262
        %306 = vmatpush.bf16.msra.mxu0 %v259
        %307 = vmatmul.bf16.gmra.mxu0 %v271
        %v308 = vpop.f32.mrf.mxu0
        %v309 = vadd.f32 %v233, %v308
        %v310 = vpop.f32.mrf.mxu0
        %311 = vdwg.mxu0
        %v312 = vpack.c.bf16 %v283, %v283
        %v313 = vpack.c.bf16 %v296, %v296
        %v314 = vpack.c.bf16 %v309, %v309
        %315 = vmatpush.bf16.xpose.msra.mxu0 0
        %316 = vmatpush.bf16.xpose.msra.mxu0 0
        %317 = vmatpush.bf16.xpose.msra.mxu0 0
        %318 = vmatpush.bf16.xpose.msra.mxu0 0
        %319 = vmatpush.bf16.xpose.msra.mxu0 0
        %320 = vmatpush.bf16.xpose.msra.mxu0 0
        %321 = vmatpush.bf16.xpose.msra.mxu0 0
        %322 = vmatpush.bf16.xpose.msra.mxu0 %v313
        %323 = vmatmul.bf16.gmra.mxu0 %v312
        %v324 = vpop.f32.mrf.mxu0
        %v325 = vadd.f32 0.0, %v324
        %v326 = vpop.f32.mrf.mxu0
        %327 = vdwg.mxu0
        %vm328 = vcmask 64512
        %v329 = vsel %vm328, %v325, -inf
        %330 = vmax.xlane.f32.xlu0 %v329
        %v331 = vpop.xlane.xlu0 %330
        %v332 = vsub.f32 %v325, %v331
        %v333 = vmul.f32 %v332, 1.442695
        %v334 = vpow.pop %v333
        %v335 = vsel %vm328, %v334, 0.0
        %336 = vadd.xlane.f32.xlu0 %v335
        %v337 = vpop.xlane.xlu0 %336
        %v338 = vrcp.pop %v337
        %v339 = vmul.f32 %v334, %v338
        %v340 = vpack.c.bf16 %v339, %v339
        %v342 = vsel %vm328, %v340, 0
        %vm344 = vcmask 1043456
        %v346 = vsel %vm344, %v314, 0
        %348 = vmatpush.bf16.msra.mxu0 0
        %349 = vmatpush.bf16.msra.mxu0 0
        %350 = vmatpush.bf16.msra.mxu0 0
        %351 = vmatpush.bf16.msra.mxu0 0
        %352 = vmatpush.bf16.msra.mxu0 0
        %353 = vmatpush.bf16.msra.mxu0 0
        %354 = vmatpush.bf16.msra.mxu0 0
        %355 = vmatpush.bf16.msra.mxu0 %v346
        %356 = vmatmul.bf16.gmra.mxu0 %v342
        %v357 = vpop.f32.mrf.mxu0
        %v358 = vadd.f32 0.0, %v357
        %v359 = vpop.f32.mrf.mxu0
        %360 = vdwg.mxu0
        %v361 = vpack.c.bf16 %v358, %v358
        %362 = vst [vmem:[%s218] sm:$0xf] %v361
        %s363 = sand.u32 %s97, 1
        %s364 = scalar_lea.sflag [#allocation4], %s363
        %s365 = sand.u32 %s97, 1
        %s366 = smul.addr %s365, 4
        %s367 = scalar_lea.vmem [#allocation8], %s366
        // Predicated region
        $region45: #{tpu_custom_call.1} parent=31 // pred_check
          %p368 = pneg %p107
        $region46: #{tpu_custom_call.1} parent=31 // pred_check_branch
          %370 = sbr.rel (%p368) target = $region48
        $region47: #{tpu_custom_call.1} parent=31 // pred_region
          %372 = vsyncadd %s364, 0
          %s373 = smul.addr %s21, 4
          %s374 = scalar_lea.hbm %s3, %s373
          %s376 = sshll.u32 %s367, 4
          %s377 = int_to_ptr.vmem [resolvable:$true] %s376
          %s378 = sshll.u32 %s374, 4
          %s379 = int_to_ptr.hbm [resolvable:$true] %s378
          %381 = dma.vmem_to_hbm [thread:$0]  %s377, 64, %s379, %s364
        $region48: #{tpu_custom_call.1} parent=31 // pred_fallthru
          _
      $region32: #{tpu_custom_call.1} parent=5 // pred_fallthru
        _
      %p382 = scmp.le.s32.totalorder 2, %s16
      // Predicated region
      $region49: #{tpu_custom_call.1} parent=5 // pred_check
        %p383 = pneg %p382
      $region50: #{tpu_custom_call.1} parent=5 // pred_check_branch
        %385 = sbr.rel (%p383) target = $region52
      $region51: #{tpu_custom_call.1} parent=5 // pred_region
        %s386 = ssub.s32 %s16, 2
        // Predicated region
        $region53: #{tpu_custom_call.1} parent=51 // pred_check
          %p387 = pneg %p113
        $region54: #{tpu_custom_call.1} parent=51 // pred_check_branch
          %389 = sbr.rel (%p387) target = $region56
        $region55: #{tpu_custom_call.1} parent=51 // pred_region
          %s390 = sand.u32 %s98, 1
          %s391 = scalar_lea.sflag [#allocation4], %s390
          %s392 = sand.u32 %s98, 1
          %s393 = smul.addr %s392, 4
          %s394 = scalar_lea.vmem [#allocation8], %s393
          %396 = dma.done %s391, 64
        $region56: #{tpu_custom_call.1} parent=51 // pred_fallthru
          _
      $region52: #{tpu_custom_call.1} parent=5 // pred_fallthru
        _
    $region6: #{tpu_custom_call.1} parent=1 // loop_footer
      %s20 = sadd.s32 1, %s16
    $region7: #{tpu_custom_call.1} parent=1 // loop_footer_branch
      %15 = sbr.rel target = $region3
    $region8: #{tpu_custom_call.1} parent=1 // loop_exit
      _
    %397 = vsyncpa [#allocation3], 1
    %s398 = scalar_lea.sflag [#allocation3], 1
    %399 = vsyncpa %s398, 1
    %400 = vsyncpa [#allocation6], 1
    %401 = vsyncpa [#allocation4], 1
    %s402 = scalar_lea.sflag [#allocation4], 1
    %403 = vsyncpa %s402, 1

</llo_original>
